<compile_context>
chip_gen: v7x
topology: tpu7x:2x2x1
jax: 0.10.0
libtpu: 0.0.40
codegen_flags: <defaults>
</compile_context>

<pallas_src>
import numpy as np
import jax
import jax.numpy as jnp
from jax.experimental import pallas as pl
from jax.experimental.pallas import tpu as pltpu


_LANE = 128
_SUBLANE = 8
# Conservative per-step VMEM budget: stays well under the default 32 MiB
# scoped limit on every generation (v7x physical VMEM is only 64 MiB).
_VMEM_BUDGET = 24 * 1024 * 1024


def _round_up(x, m):
    return ((x + m - 1) // m) * m


def _nearest_onehot(out_size: int, in_size: int) -> np.ndarray:
    """One-hot (out_size, in_size) matrix implementing PyTorch 'nearest'
    resize (src_idx = floor(dst_idx * in / out))."""
    idx = np.minimum((np.arange(out_size) * in_size) // out_size, in_size - 1)
    m = np.zeros((out_size, in_size), dtype=np.float32)
    m[np.arange(out_size), idx] = 1.0
    return m


def _kron_select(H, W, HW_pad, h_in, w_in, dtype):
    """Selection matrix S (h_in*w_in, HW_pad): for row-major flattened maps,
    x_flat @ S reproduces nearest-neighbor resize; padded columns are zero."""
    sh = _nearest_onehot(H, h_in)          # (H, h_in)
    sw = _nearest_onehot(W, w_in)          # (W, w_in)
    S = np.kron(sh.T, sw.T)                # (h_in*w_in, H*W), one-hot columns
    if HW_pad != H * W:
        S = np.pad(S, ((0, 0), (0, HW_pad - H * W)))
    return jnp.asarray(S, dtype=dtype)


def _resize_cat_kernel(at1_ref, at3_ref, at5_ref, s3_ref, s5_ref, o_ref):
    # Per grid step (B batch elements, all spatial dims flattened & padded):
    #   at1_ref: (B, C1, HWp)          pass-through channels
    #   at3_ref: (B*C3, hw3)           batch folded into rows (n-major)
    #   at5_ref: (B*C5, hw5)
    #   s3_ref : (hw3, HWp)  s5_ref: (hw5, HWp)    one-hot selection matrices
    #   o_ref  : (B, C1 + C3 + C5, HWp)
    B, C1, _ = at1_ref.shape
    C3 = at3_ref.shape[0] // B
    C5 = at5_ref.shape[0] // B

    # at1 pass-through: one lane-dense store for the whole batch tile.
    o_ref[:, :C1, :] = at1_ref[...].astype(o_ref.dtype)

    # ONE MXU matmul per source, M = B*C (exact gather: S is one-hot).
    r3 = jnp.dot(at3_ref[...], s3_ref[...],
                 preferred_element_type=jnp.float32).astype(o_ref.dtype)
    r5 = jnp.dot(at5_ref[...], s5_ref[...],
                 preferred_element_type=jnp.float32).astype(o_ref.dtype)

    # Scatter the folded results into per-batch channel slabs (static slices,
    # full-lane stores; only the sublane offset varies per n).
    for n in range(B):
        o_ref[n, C1:C1 + C3, :] = r3[n * C3:(n + 1) * C3, :]
        o_ref[n, C1 + C3:, :] = r5[n * C5:(n + 1) * C5, :]


def _is_multi_tensorcore() -> bool:
    """Best-effort detection of chips with >1 schedulable TensorCore per
    device (v7x, and megacore v4/v5p).  Falls back to False (fattest tile)."""
    try:
        kind = jax.devices()[0].device_kind.lower()
    except Exception:
        return False
    return any(t in kind for t in ("v7", "7x", "v4", "v5p"))


def _block_bytes(sub, lane, itemsize):
    return (_round_up(max(sub, 1), _SUBLANE)
            * _round_up(max(lane, 1), _LANE) * itemsize)


def _pick_batch_tile(N, C1, C3, C5, HW_pad, hw3, hw5, itemsize):
    C_out = C1 + C3 + C5

    def aligned(B):
        # The 2-D batch-folded blocks need an 8-aligned sublane dim unless
        # they cover the full array (BlockSpec (8,128) rule).
        for C in (C3, C5):
            bc = B * C
            if bc != N * C and bc % _SUBLANE != 0:
                return False
        return True

    def vmem_ok(B):
        per_step = (B * _block_bytes(C1, HW_pad, itemsize)          # at1
                    + _block_bytes(B * C3, hw3, itemsize)           # at3
                    + _block_bytes(B * C5, hw5, itemsize)           # at5
                    + B * _block_bytes(C_out, HW_pad, itemsize))    # out
        s_bytes = (_block_bytes(hw3, HW_pad, itemsize)
                   + _block_bytes(hw5, HW_pad, itemsize))
        # Pipelined blocks are double-buffered; count S twice too (safe).
        return 2 * (per_step + s_bytes) <= _VMEM_BUDGET

    divisors = [d for d in range(1, N + 1) if N % d == 0]
    valid = [B for B in divisors if aligned(B) and vmem_ok(B)]
    if not valid:
        valid = [B for B in divisors if aligned(B)] or [N]

    if _is_multi_tensorcore():
        # Keep >= 2 parallel grid steps so both TensorCores get work.
        two_step = [B for B in valid if N // B >= 2]
        if two_step:
            return max(two_step)
    # Single-TC chips: fattest tile to amortize per-step pipeline overhead.
    return max(valid)


def resize_cat(at1, at3, at5):
    N, C1, H, W = at1.shape
    _, C3, h3, w3 = at3.shape
    _, C5, h5, w5 = at5.shape
    C_out = C1 + C3 + C5
    HW = H * W
    HW_pad = _round_up(HW, _LANE)
    hw3 = h3 * w3
    hw5 = h5 * w5
    itemsize = jnp.dtype(at1.dtype).itemsize

    # Lane-dense layout: trailing dim = H*W, padded to a multiple of 128.
    at1f = at1.reshape(N, C1, HW)
    if HW_pad != HW:
        at1f = jnp.pad(at1f, ((0, 0), (0, 0), (0, HW_pad - HW)))
    # Batch folded into the matmul M dimension (free row-major collapse).
    at3f = at3.reshape(N * C3, hw3)
    at5f = at5.reshape(N * C5, hw5)

    S3 = _kron_select(H, W, HW_pad, h3, w3, at3.dtype)   # (hw3, HW_pad)
    S5 = _kron_select(H, W, HW_pad, h5, w5, at5.dtype)   # (hw5, HW_pad)

    B = _pick_batch_tile(N, C1, C3, C5, HW_pad, hw3, hw5, itemsize)
    grid = (N // B,)

    outf = pl.pallas_call(
        _resize_cat_kernel,
        out_shape=jax.ShapeDtypeStruct((N, C_out, HW_pad), at1.dtype),
        grid=grid,
        in_specs=[
            pl.BlockSpec((B, C1, HW_pad), lambda b: (b, 0, 0)),
            pl.BlockSpec((B * C3, hw3), lambda b: (b, 0)),
            pl.BlockSpec((B * C5, hw5), lambda b: (b, 0)),
            pl.BlockSpec((hw3, HW_pad), lambda b: (0, 0)),
            pl.BlockSpec((hw5, HW_pad), lambda b: (0, 0)),
        ],
        out_specs=pl.BlockSpec((B, C_out, HW_pad), lambda b: (b, 0, 0)),
        compiler_params=pltpu.CompilerParams(
            dimension_semantics=("parallel",)),
    )(at1f, at3f, at5f, S3, S5)

    if HW_pad != HW:
        outf = outf[:, :, :HW]
    return outf.reshape(N, C_out, H, W)


def _reference(at1, at3, at5):
    """Plain-JAX reference reproducing F.interpolate(mode='nearest') + cat."""
    N, C1, H, W = at1.shape

    def nearest(x):
        _, _, h_in, w_in = x.shape
        hi = np.minimum((np.arange(H) * h_in) // H, h_in - 1)
        wi = np.minimum((np.arange(W) * w_in) // W, w_in - 1)
        return x[:, :, hi, :][:, :, :, wi]

    return jnp.concatenate([at1, nearest(at3), nearest(at5)], axis=1)


if __name__ == "__main__":
    key = jax.random.PRNGKey(0)
    k1, k3, k5 = jax.random.split(key, 3)

    # Small shapes consistent with WSDAN attention maps at different strides.
    at1 = jax.random.normal(k1, (2, 4, 16, 16), dtype=jnp.float32)
    at3 = jax.random.normal(k3, (2, 4, 8, 8), dtype=jnp.float32)
    at5 = jax.random.normal(k5, (2, 4, 4, 4), dtype=jnp.float32)

    out = resize_cat(at1, at3, at5)
    out = jax.block_until_ready(out)

    ref = _reference(at1, at3, at5)
    assert out.shape == (2, 12, 16, 16), out.shape
    assert jnp.allclose(out, ref, atol=1e-5, rtol=1e-5), "mismatch vs reference"

    print("KERNEL_OK")
</pallas_src>

<mosaic_0001>
module attributes {stable_mosaic.version = 11 : i64} {
  func.func @_resize_cat_kernel(%arg0: i32, %arg1: memref<2x4x256xf32, #tpu.memory_space<vmem>>, %arg2: memref<8x64xf32, #tpu.memory_space<vmem>>, %arg3: memref<8x16xf32, #tpu.memory_space<vmem>>, %arg4: memref<64x256xf32, #tpu.memory_space<vmem>>, %arg5: memref<16x256xf32, #tpu.memory_space<vmem>>, %arg6: memref<2x12x256xf32, #tpu.memory_space<vmem>>) attributes {dimension_semantics = [#tpu.dimension_semantics<parallel>], iteration_bounds = array<i64: 1>, scalar_prefetch = 0 : i64, scratch_operands = 0 : i64, tpu.core_type = #tpu.core_type<tc>, window_params = [{transform_indices = @transform_0, window_bounds = array<i64: 2, 4, 256>}, {transform_indices = @transform_1, window_bounds = array<i64: 8, 64>}, {transform_indices = @transform_2, window_bounds = array<i64: 8, 16>}, {pipeline_mode = #tpu.pipeline_mode<synchronous>, transform_indices = @transform_3, window_bounds = array<i64: 64, 256>}, {pipeline_mode = #tpu.pipeline_mode<synchronous>, transform_indices = @transform_4, window_bounds = array<i64: 16, 256>}, {transform_indices = @transform_5, window_bounds = array<i64: 2, 12, 256>}]} {
    %c0 = arith.constant 0 : index
    %c0_0 = arith.constant 0 : index
    %c0_1 = arith.constant 0 : index
    %0 = vector.load %arg1[%c0, %c0_0, %c0_1] : memref<2x4x256xf32, #tpu.memory_space<vmem>>, vector<2x4x256xf32>
    %c0_2 = arith.constant 0 : index
    %c0_3 = arith.constant 0 : index
    %c0_4 = arith.constant 0 : index
    %1 = vector.load %arg6[%c0_2, %c0_3, %c0_4] : memref<2x12x256xf32, #tpu.memory_space<vmem>>, vector<2x4x256xf32>
    tpu.vector_store %arg6[%c0_2, %c0_3, %c0_4], %0 {strides = array<i32>} : memref<2x12x256xf32, #tpu.memory_space<vmem>>, vector<2x4x256xf32>,
    %c0_5 = arith.constant 0 : index
    %c0_6 = arith.constant 0 : index
    %2 = vector.load %arg2[%c0_5, %c0_6] : memref<8x64xf32, #tpu.memory_space<vmem>>, vector<8x64xf32>
    %c0_7 = arith.constant 0 : index
    %c0_8 = arith.constant 0 : index
    %3 = vector.load %arg4[%c0_7, %c0_8] : memref<64x256xf32, #tpu.memory_space<vmem>>, vector<64x256xf32>
    %cst = arith.constant dense<0.000000e+00> : vector<8x256xf32>
    %4 = tpu.matmul %2, %3, %cst {dimension_numbers = #tpu.dot_dimension_numbers<[1], [0], [0], [1], [0, 0, 1, 1], [], []>} : vector<8x64xf32>, vector<64x256xf32>, vector<8x256xf32> -> vector<8x256xf32>
    %c0_9 = arith.constant 0 : index
    %c0_10 = arith.constant 0 : index
    %5 = vector.load %arg3[%c0_9, %c0_10] : memref<8x16xf32, #tpu.memory_space<vmem>>, vector<8x16xf32>
    %c0_11 = arith.constant 0 : index
    %c0_12 = arith.constant 0 : index
    %6 = vector.load %arg5[%c0_11, %c0_12] : memref<16x256xf32, #tpu.memory_space<vmem>>, vector<16x256xf32>
    %cst_13 = arith.constant dense<0.000000e+00> : vector<8x256xf32>
    %7 = tpu.matmul %5, %6, %cst_13 {dimension_numbers = #tpu.dot_dimension_numbers<[1], [0], [0], [1], [0, 0, 1, 1], [], []>} : vector<8x16xf32>, vector<16x256xf32>, vector<8x256xf32> -> vector<8x256xf32>
    %8 = vector.extract_strided_slice %4 {offsets = [0, 0], sizes = [4, 256], strides = [1, 1]} : vector<8x256xf32> to vector<4x256xf32>
    %c0_14 = arith.constant 0 : index
    %c4 = arith.constant 4 : index
    %c0_15 = arith.constant 0 : index
    %9 = vector.load %arg6[%c0_14, %c4, %c0_15] : memref<2x12x256xf32, #tpu.memory_space<vmem>>, vector<1x4x256xf32>
    %10 = vector.shape_cast %9 : vector<1x4x256xf32> to vector<4x256xf32>
    %11 = vector.shape_cast %8 : vector<4x256xf32> to vector<1x4x256xf32>
    tpu.vector_store %arg6[%c0_14, %c4, %c0_15], %11 {strides = array<i32>} : memref<2x12x256xf32, #tpu.memory_space<vmem>>, vector<1x4x256xf32>,
    %12 = vector.extract_strided_slice %7 {offsets = [0, 0], sizes = [4, 256], strides = [1, 1]} : vector<8x256xf32> to vector<4x256xf32>
    %c0_16 = arith.constant 0 : index
    %c8 = arith.constant 8 : index
    %c0_17 = arith.constant 0 : index
    %13 = vector.load %arg6[%c0_16, %c8, %c0_17] : memref<2x12x256xf32, #tpu.memory_space<vmem>>, vector<1x4x256xf32>
    %14 = vector.shape_cast %13 : vector<1x4x256xf32> to vector<4x256xf32>
    %15 = vector.shape_cast %12 : vector<4x256xf32> to vector<1x4x256xf32>
    tpu.vector_store %arg6[%c0_16, %c8, %c0_17], %15 {strides = array<i32>} : memref<2x12x256xf32, #tpu.memory_space<vmem>>, vector<1x4x256xf32>,
    %16 = vector.extract_strided_slice %4 {offsets = [4, 0], sizes = [4, 256], strides = [1, 1]} : vector<8x256xf32> to vector<4x256xf32>
    %c1 = arith.constant 1 : index
    %c4_18 = arith.constant 4 : index
    %c0_19 = arith.constant 0 : index
    %17 = vector.load %arg6[%c1, %c4_18, %c0_19] : memref<2x12x256xf32, #tpu.memory_space<vmem>>, vector<1x4x256xf32>
    %18 = vector.shape_cast %17 : vector<1x4x256xf32> to vector<4x256xf32>
    %19 = vector.shape_cast %16 : vector<4x256xf32> to vector<1x4x256xf32>
    tpu.vector_store %arg6[%c1, %c4_18, %c0_19], %19 {strides = array<i32>} : memref<2x12x256xf32, #tpu.memory_space<vmem>>, vector<1x4x256xf32>,
    %20 = vector.extract_strided_slice %7 {offsets = [4, 0], sizes = [4, 256], strides = [1, 1]} : vector<8x256xf32> to vector<4x256xf32>
    %c1_20 = arith.constant 1 : index
    %c8_21 = arith.constant 8 : index
    %c0_22 = arith.constant 0 : index
    %21 = vector.load %arg6[%c1_20, %c8_21, %c0_22] : memref<2x12x256xf32, #tpu.memory_space<vmem>>, vector<1x4x256xf32>
    %22 = vector.shape_cast %21 : vector<1x4x256xf32> to vector<4x256xf32>
    %23 = vector.shape_cast %20 : vector<4x256xf32> to vector<1x4x256xf32>
    tpu.vector_store %arg6[%c1_20, %c8_21, %c0_22], %23 {strides = array<i32>} : memref<2x12x256xf32, #tpu.memory_space<vmem>>, vector<1x4x256xf32>,
    return
  }
  func.func @transform_0(%arg0: i32) -> (i32, i32, i32) {
    %c0_i32 = arith.constant 0 : i32
    %c0_i32_0 = arith.constant 0 : i32
    %c0_i32_1 = arith.constant 0 : i32
    return %arg0, %c0_i32, %c0_i32_0 : i32, i32, i32
  }
  func.func @transform_1(%arg0: i32) -> (i32, i32) {
    %c0_i32 = arith.constant 0 : i32
    %c0_i32_0 = arith.constant 0 : i32
    return %arg0, %c0_i32 : i32, i32
  }
  func.func @transform_2(%arg0: i32) -> (i32, i32) {
    %c0_i32 = arith.constant 0 : i32
    %c0_i32_0 = arith.constant 0 : i32
    return %arg0, %c0_i32 : i32, i32
  }
  func.func @transform_3(%arg0: i32) -> (i32, i32) {
    %c0_i32 = arith.constant 0 : i32
    %c0_i32_0 = arith.constant 0 : i32
    %c0_i32_1 = arith.constant 0 : i32
    return %c0_i32, %c0_i32_0 : i32, i32
  }
  func.func @transform_4(%arg0: i32) -> (i32, i32) {
    %c0_i32 = arith.constant 0 : i32
    %c0_i32_0 = arith.constant 0 : i32
    %c0_i32_1 = arith.constant 0 : i32
    return %c0_i32, %c0_i32_0 : i32, i32
  }
  func.func @transform_5(%arg0: i32) -> (i32, i32, i32) {
    %c0_i32 = arith.constant 0 : i32
    %c0_i32_0 = arith.constant 0 : i32
    %c0_i32_1 = arith.constant 0 : i32
    return %arg0, %c0_i32, %c0_i32_0 : i32, i32, i32
  }
}

</mosaic_0001>

<llo_original>
// kernel: tpu_custom_call.1
$region0: #{tpu_custom_call.1}
  #allocation0 [shape = 'u32[]', space=smem, size = 0x4, offset = 0x4, fixed_abs, tag = 'smem constant byte address 0x4 - core index']
  #allocation1 [shape = 'u32[144,128]{1,0:T(1,128)}', space=vmem, size = 0x12000, scoped, tag = 'internal scratch']
  %s0 = inlined_call_operand.hbm [shape: f32[2,4,256], index: 0, kind: input, shape index: {}]
  %s1 = inlined_call_operand.hbm [shape: f32[8,64], index: 1, kind: input, shape index: {}]
  %s2 = inlined_call_operand.hbm [shape: f32[8,16], index: 2, kind: input, shape index: {}]
  %s3 = inlined_call_operand.hbm [shape: f32[64,256], index: 3, kind: input, shape index: {}]
  %s4 = inlined_call_operand.hbm [shape: f32[16,256], index: 4, kind: input, shape index: {}]
  %s5 = inlined_call_operand.vmem [shape: f32[2,12,256], index: 5, kind: output, shape index: {}]
  %s6 = sld [smem:[#allocation0]]
  $region50: #{tpu_custom_call.1} parent=0
    _
  %s8 = ssub.s32 1, %s6
  %s9 = scalar_select 0, %s8, %s6
  $region1: #{tpu_custom_call.1} parent=0
    #allocation2 [shape = 'u8[8192]{0}', space=vmem, size = 0x2000, scoped, tag = 'input window, operand 0, single buffered']
    #allocation3 [shape = 's32[1]{0}', space=sflag, size = 0x4, scoped, tag = 'scoped memory for tpu_custom_call.1']
    #allocation4 [shape = 'u8[4096]{0}', space=vmem, size = 0x1000, scoped, tag = 'input window, operand 1, single buffered']
    #allocation5 [shape = 's32[1]{0}', space=sflag, size = 0x4, scoped, tag = 'scoped memory for tpu_custom_call.1']
    #allocation6 [shape = 'u8[4096]{0}', space=vmem, size = 0x1000, scoped, tag = 'input window, operand 2, single buffered']
    #allocation7 [shape = 'u8[65536]{0}', space=vmem, size = 0x10000, scoped, tag = 'input window, operand 3, single buffered']
    #allocation8 [shape = 's32[1]{0}', space=sflag, size = 0x4, scoped, tag = 'scoped memory for tpu_custom_call.1']
    #allocation9 [shape = 'u8[16384]{0}', space=vmem, size = 0x4000, scoped, tag = 'input window, operand 4, single buffered']
    %10 = vsyncpa [#allocation3], 0
    %11 = vsyncpa [#allocation5], 0
    %12 = vsyncpa [#allocation8], 0
    // Predicated region
    $region2: #{tpu_custom_call.1} parent=1 // pred_check
      _
    $region3: #{tpu_custom_call.1} parent=1 // pred_check_branch
      %14 = sbr.rel (0) target = $region5
    $region4: #{tpu_custom_call.1} parent=1 // pred_region
      %s16 = ssub.s32 256, 256
      %17 = vsyncadd [#allocation3], %s16
      %s18 = sshll.u32 [#allocation2], 4
      %s19 = int_to_ptr.vmem [resolvable:$true] %s18
      %24 = dma.hbm_to_vmem [thread:$0]  %s0, 256, %s19, [#allocation3], 128, 128, 8
    $region5: #{tpu_custom_call.1} parent=1 // pred_fallthru
      _
    // Predicated region
    $region6: #{tpu_custom_call.1} parent=1 // pred_check
      _
    $region7: #{tpu_custom_call.1} parent=1 // pred_check_branch
      %26 = sbr.rel (0) target = $region9
    $region8: #{tpu_custom_call.1} parent=1 // pred_region
      %s28 = ssub.s32 128, 128
      %29 = vsyncadd [#allocation5], %s28
      %s31 = sshll.u32 [#allocation4], 4
      %s32 = int_to_ptr.vmem [resolvable:$true] %s31
      %34 = dma.hbm_to_vmem [thread:$0]  %s1, 128, %s32, [#allocation5]
    $region9: #{tpu_custom_call.1} parent=1 // pred_fallthru
      _
    // Predicated region
    $region10: #{tpu_custom_call.1} parent=1 // pred_check
      _
    $region11: #{tpu_custom_call.1} parent=1 // pred_check_branch
      %36 = sbr.rel (0) target = $region13
    $region12: #{tpu_custom_call.1} parent=1 // pred_region
      %s38 = ssub.s32 128, 128
      %39 = vsyncadd [#allocation5], %s38
      %s41 = sshll.u32 [#allocation6], 4
      %s42 = int_to_ptr.vmem [resolvable:$true] %s41
      %44 = dma.hbm_to_vmem [thread:$0]  %s2, 128, %s42, [#allocation5]
    $region13: #{tpu_custom_call.1} parent=1 // pred_fallthru
      _
    // Predicated region
    $region14: #{tpu_custom_call.1} parent=1 // pred_check
      _
    $region15: #{tpu_custom_call.1} parent=1 // pred_check_branch
      %46 = sbr.rel (0) target = $region17
    $region16: #{tpu_custom_call.1} parent=1 // pred_region
      %s48 = ssub.s32 2048, 2048
      %49 = vsyncadd [#allocation8], %s48
      %s50 = sshll.u32 [#allocation7], 4
      %s51 = int_to_ptr.vmem [resolvable:$true] %s50
      %56 = dma.hbm_to_vmem [thread:$0]  %s3, 2048, %s51, [#allocation8], 256, 256, 16
    $region17: #{tpu_custom_call.1} parent=1 // pred_fallthru
      _
    // Predicated region
    $region18: #{tpu_custom_call.1} parent=1 // pred_check
      _
    $region19: #{tpu_custom_call.1} parent=1 // pred_check_branch
      %58 = sbr.rel (0) target = $region21
    $region20: #{tpu_custom_call.1} parent=1 // pred_region
      %s60 = ssub.s32 512, 512
      %61 = vsyncadd [#allocation8], %s60
      %s62 = sshll.u32 [#allocation9], 4
      %s63 = int_to_ptr.vmem [resolvable:$true] %s62
      %68 = dma.hbm_to_vmem [thread:$0]  %s4, 512, %s63, [#allocation8], 256, 256, 16
    $region21: #{tpu_custom_call.1} parent=1 // pred_fallthru
      _
    // Predicated region
    $region22: #{tpu_custom_call.1} parent=1 // pred_check
      _
    $region23: #{tpu_custom_call.1} parent=1 // pred_check_branch
      %70 = sbr.rel (0) target = $region25
    $region24: #{tpu_custom_call.1} parent=1 // pred_region
      %71 = dma.done [#allocation3], 256
    $region25: #{tpu_custom_call.1} parent=1 // pred_fallthru
      _
    // Predicated region
    $region26: #{tpu_custom_call.1} parent=1 // pred_check
      _
    $region27: #{tpu_custom_call.1} parent=1 // pred_check_branch
      %73 = sbr.rel (0) target = $region29
    $region28: #{tpu_custom_call.1} parent=1 // pred_region
      %74 = dma.done [#allocation5], 128
    $region29: #{tpu_custom_call.1} parent=1 // pred_fallthru
      _
    // Predicated region
    $region30: #{tpu_custom_call.1} parent=1 // pred_check
      _
    $region31: #{tpu_custom_call.1} parent=1 // pred_check_branch
      %76 = sbr.rel (0) target = $region33
    $region32: #{tpu_custom_call.1} parent=1 // pred_region
      %77 = dma.done [#allocation5], 128
    $region33: #{tpu_custom_call.1} parent=1 // pred_fallthru
      _
    // Predicated region
    $region34: #{tpu_custom_call.1} parent=1 // pred_check
      _
    $region35: #{tpu_custom_call.1} parent=1 // pred_check_branch
      %79 = sbr.rel (0) target = $region37
    $region36: #{tpu_custom_call.1} parent=1 // pred_region
      %80 = dma.done [#allocation8], 2048
    $region37: #{tpu_custom_call.1} parent=1 // pred_fallthru
      _
    // Predicated region
    $region38: #{tpu_custom_call.1} parent=1 // pred_check
      _
    $region39: #{tpu_custom_call.1} parent=1 // pred_check_branch
      %82 = sbr.rel (0) target = $region41
    $region40: #{tpu_custom_call.1} parent=1 // pred_region
      %83 = dma.done [#allocation8], 512
    $region41: #{tpu_custom_call.1} parent=1 // pred_fallthru
      _
    %v84 = vld [vmem:[#allocation2] sm:$0xff]
    %v85 = vld [vmem:[#allocation2 + $0x8] sm:$0xff]
    %v88 = vcombine.high %v84, %v84
    %v89 = vcombine.high %v85, %v85
    %92 = vst [vmem:[%s5] sm:$0xf] %v84
    %93 = vst [vmem:[%s5 + $0x8] sm:$0xf] %v88
    %94 = vst [vmem:[%s5 + $0x20] sm:$0xf] %v85
    %95 = vst [vmem:[%s5 + $0x28] sm:$0xf] %v89
    %v96 = vld [vmem:[#allocation4] sm:$0xff]
    %v97 = vld [vmem:[#allocation7] sm:$0xff]
    %v98 = vld [vmem:[#allocation7 + $0x8] sm:$0xff]
    %v99 = vld [vmem:[#allocation7 + $0x10] sm:$0xff]
    %v100 = vld [vmem:[#allocation7 + $0x18] sm:$0xff]
    %v101 = vld [vmem:[#allocation7 + $0x20] sm:$0xff]
    %v102 = vld [vmem:[#allocation7 + $0x28] sm:$0xff]
    %v103 = vld [vmem:[#allocation7 + $0x30] sm:$0xff]
    %v104 = vld [vmem:[#allocation7 + $0x38] sm:$0xff]
    %v105 = vld [vmem:[#allocation7 + $0x40] sm:$0xff]
    %v106 = vld [vmem:[#allocation7 + $0x48] sm:$0xff]
    %v107 = vld [vmem:[#allocation7 + $0x50] sm:$0xff]
    %v108 = vld [vmem:[#allocation7 + $0x58] sm:$0xff]
    %v109 = vld [vmem:[#allocation7 + $0x60] sm:$0xff]
    %v110 = vld [vmem:[#allocation7 + $0x68] sm:$0xff]
    %v111 = vld [vmem:[#allocation7 + $0x70] sm:$0xff]
    %v112 = vld [vmem:[#allocation7 + $0x78] sm:$0xff]
    %vm113 = vcmask 523264
    %v115 = vsel %vm113, %v96, 0
    %117 = vmatprep.subr.mxu0 %v98
    %118 = vmatpush1.msra.mxu0 %v97
    %119 = vmatprep.subr.mxu0 %v100
    %120 = vmatpush1.msra.mxu0 %v99
    %121 = vmatprep.subr.mxu0 %v102
    %122 = vmatpush1.msra.mxu0 %v101
    %123 = vmatprep.subr.mxu0 %v104
    %124 = vmatpush1.msra.mxu0 %v103
    %125 = vmatprep.subr.mxu0 %v106
    %126 = vmatpush1.msra.mxu0 %v105
    %127 = vmatprep.subr.mxu0 %v108
    %128 = vmatpush1.msra.mxu0 %v107
    %129 = vmatprep.subr.mxu0 %v110
    %130 = vmatpush1.msra.mxu0 %v109
    %131 = vmatprep.subr.mxu0 %v112
    %132 = vmatpush1.msra.mxu0 %v111
    %133 = vmatprep.subr.mxu0 0.0
    %134 = vmatpush1.msra.mxu0 0.0
    %135 = vmatprep.subr.mxu0 0.0
    %136 = vmatpush1.msra.mxu0 0.0
    %137 = vmatprep.subr.mxu0 0.0
    %138 = vmatpush1.msra.mxu0 0.0
    %139 = vmatprep.subr.mxu0 0.0
    %140 = vmatpush1.msra.mxu0 0.0
    %141 = vmatprep.subr.mxu0 0.0
    %142 = vmatpush1.msra.mxu0 0.0
    %143 = vmatprep.subr.mxu0 0.0
    %144 = vmatpush1.msra.mxu0 0.0
    %145 = vmatprep.subr.mxu0 0.0
    %146 = vmatpush1.msra.mxu0 0.0
    %147 = vmatprep.subr.mxu0 0.0
    %148 = vmatpush1.msra.mxu0 0.0
    %149 = vmatprep.subr.mxu0 0.0
    %150 = vmatpush1.msra.mxu0 0.0
    %151 = vmatprep.subr.mxu0 0.0
    %152 = vmatpush1.msra.mxu0 0.0
    %153 = vmatprep.subr.mxu0 0.0
    %154 = vmatpush1.msra.mxu0 0.0
    %155 = vmatprep.subr.mxu0 0.0
    %156 = vmatpush1.msra.mxu0 0.0
    %157 = vmatprep.subr.mxu0 0.0
    %158 = vmatpush1.msra.mxu0 0.0
    %159 = vmatprep.subr.mxu0 0.0
    %160 = vmatpush1.msra.mxu0 0.0
    %161 = vmatprep.subr.mxu0 0.0
    %162 = vmatpush1.msra.mxu0 0.0
    %163 = vmatprep.subr.mxu0 0.0
    %164 = vmatpush1.msra.mxu0 0.0
    %165 = vmatprep.subr.mxu0 0.0
    %166 = vmatpush1.msra.mxu0 0.0
    %167 = vmatprep.subr.mxu0 0.0
    %168 = vmatpush1.msra.mxu0 0.0
    %169 = vmatprep.subr.mxu0 0.0
    %170 = vmatpush1.msra.mxu0 0.0
    %171 = vmatprep.subr.mxu0 0.0
    %172 = vmatpush1.msra.mxu0 0.0
    %173 = vmatprep.subr.mxu0 0.0
    %174 = vmatpush1.msra.mxu0 0.0
    %175 = vmatprep.subr.mxu0 0.0
    %176 = vmatpush1.msra.mxu0 0.0
    %177 = vmatprep.subr.mxu0 0.0
    %178 = vmatpush1.msra.mxu0 0.0
    %179 = vmatprep.subr.mxu0 0.0
    %180 = vmatpush1.msra.mxu0 0.0
    %181 = vmatprep.mubr.f32.mxu0 0.0
    %182 = vmatmul.mubr.f32.gmra.mrb[0].mxu0 %v115
    %v183 = vpop.f32.mrb[0].mxu0
    %v184 = vadd.f32 0.0, %v183
    %v185 = vpop.f32.mrb[0].mxu0
    %v186 = vadd.f32 0.0, %v185
    %187 = vdwg.mxu0
    %v188 = vld [vmem:[#allocation6] sm:$0xff]
    %v189 = vld [vmem:[#allocation9] sm:$0xff]
    %v190 = vld [vmem:[#allocation9 + $0x8] sm:$0xff]
    %v191 = vld [vmem:[#allocation9 + $0x10] sm:$0xff]
    %v192 = vld [vmem:[#allocation9 + $0x18] sm:$0xff]
    %vm193 = vcmask 130048
    %v195 = vsel %vm193, %v188, 0
    %197 = vmatprep.subr.mxu0 %v190
    %198 = vmatpush1.msra.mxu0 %v189
    %199 = vmatprep.subr.mxu0 %v192
    %200 = vmatpush1.msra.mxu0 %v191
    %201 = vmatprep.subr.mxu0 0.0
    %202 = vmatpush1.msra.mxu0 0.0
    %203 = vmatprep.subr.mxu0 0.0
    %204 = vmatpush1.msra.mxu0 0.0
    %205 = vmatprep.subr.mxu0 0.0
    %206 = vmatpush1.msra.mxu0 0.0
    %207 = vmatprep.subr.mxu0 0.0
    %208 = vmatpush1.msra.mxu0 0.0
    %209 = vmatprep.subr.mxu0 0.0
    %210 = vmatpush1.msra.mxu0 0.0
    %211 = vmatprep.subr.mxu0 0.0
    %212 = vmatpush1.msra.mxu0 0.0
    %213 = vmatprep.subr.mxu0 0.0
    %214 = vmatpush1.msra.mxu0 0.0
    %215 = vmatprep.subr.mxu0 0.0
    %216 = vmatpush1.msra.mxu0 0.0
    %217 = vmatprep.subr.mxu0 0.0
    %218 = vmatpush1.msra.mxu0 0.0
    %219 = vmatprep.subr.mxu0 0.0
    %220 = vmatpush1.msra.mxu0 0.0
    %221 = vmatprep.subr.mxu0 0.0
    %222 = vmatpush1.msra.mxu0 0.0
    %223 = vmatprep.subr.mxu0 0.0
    %224 = vmatpush1.msra.mxu0 0.0
    %225 = vmatprep.subr.mxu0 0.0
    %226 = vmatpush1.msra.mxu0 0.0
    %227 = vmatprep.subr.mxu0 0.0
    %228 = vmatpush1.msra.mxu0 0.0
    %229 = vmatprep.subr.mxu0 0.0
    %230 = vmatpush1.msra.mxu0 0.0
    %231 = vmatprep.subr.mxu0 0.0
    %232 = vmatpush1.msra.mxu0 0.0
    %233 = vmatprep.subr.mxu0 0.0
    %234 = vmatpush1.msra.mxu0 0.0
    %235 = vmatprep.subr.mxu0 0.0
    %236 = vmatpush1.msra.mxu0 0.0
    %237 = vmatprep.subr.mxu0 0.0
    %238 = vmatpush1.msra.mxu0 0.0
    %239 = vmatprep.subr.mxu0 0.0
    %240 = vmatpush1.msra.mxu0 0.0
    %241 = vmatprep.subr.mxu0 0.0
    %242 = vmatpush1.msra.mxu0 0.0
    %243 = vmatprep.subr.mxu0 0.0
    %244 = vmatpush1.msra.mxu0 0.0
    %245 = vmatprep.subr.mxu0 0.0
    %246 = vmatpush1.msra.mxu0 0.0
    %247 = vmatprep.subr.mxu0 0.0
    %248 = vmatpush1.msra.mxu0 0.0
    %249 = vmatprep.subr.mxu0 0.0
    %250 = vmatpush1.msra.mxu0 0.0
    %251 = vmatprep.subr.mxu0 0.0
    %252 = vmatpush1.msra.mxu0 0.0
    %253 = vmatprep.subr.mxu0 0.0
    %254 = vmatpush1.msra.mxu0 0.0
    %255 = vmatprep.subr.mxu0 0.0
    %256 = vmatpush1.msra.mxu0 0.0
    %257 = vmatprep.subr.mxu0 0.0
    %258 = vmatpush1.msra.mxu0 0.0
    %259 = vmatprep.subr.mxu0 0.0
    %260 = vmatpush1.msra.mxu0 0.0
    %261 = vmatprep.mubr.f32.mxu0 0.0
    %262 = vmatmul.mubr.f32.gmra.mrb[0].mxu0 %v195
    %v263 = vpop.f32.mrb[0].mxu0
    %v264 = vadd.f32 0.0, %v263
    %v265 = vpop.f32.mrb[0].mxu0
    %v266 = vadd.f32 0.0, %v265
    %267 = vdwg.mxu0
    %v270 = vrot.slane %v184, 4
    %v271 = vrot.slane %v186, 4
    %274 = vst [vmem:[%s5] sm:$0xf0] %v270
    %275 = vst [vmem:[%s5 + $0x8] sm:$0xf0] %v271
    %276 = vst [vmem:[%s5 + $0x10] sm:$0xf] %v264
    %277 = vst [vmem:[%s5 + $0x18] sm:$0xf] %v266
    %s278 = scalar_lea.vmem %s5, 32
    %279 = vst [vmem:[%s278] sm:$0xf0] %v184
    %280 = vst [vmem:[%s278 + $0x8] sm:$0xf0] %v186
    %v283 = vrot.slane %v264, 4
    %v284 = vrot.slane %v266, 4
    %287 = vst [vmem:[%s278 + $0x10] sm:$0xf] %v283
    %288 = vst [vmem:[%s278 + $0x18] sm:$0xf] %v284
    // Predicated region
    $region42: #{tpu_custom_call.1} parent=1 // pred_check
      _
    $region43: #{tpu_custom_call.1} parent=1 // pred_check_branch
      %290 = sbr.rel (0) target = $region45
    $region44: #{tpu_custom_call.1} parent=1 // pred_region
      _
    $region45: #{tpu_custom_call.1} parent=1 // pred_fallthru
      _
    // Predicated region
    $region46: #{tpu_custom_call.1} parent=1 // pred_check
      _
    $region47: #{tpu_custom_call.1} parent=1 // pred_check_branch
      %292 = sbr.rel (0) target = $region49
    $region48: #{tpu_custom_call.1} parent=1 // pred_region
      _
    $region49: #{tpu_custom_call.1} parent=1 // pred_fallthru
      _
    %293 = vsyncpa [#allocation3], 1
    %294 = vsyncpa [#allocation5], 1
    %295 = vsyncpa [#allocation8], 1

</llo_original>
